<compile_context>
chip_gen: v7x
topology: tpu7x:2x2x1
jax: 0.10.0
libtpu: 0.0.40
codegen_flags: <defaults>
</compile_context>

<pallas_src>
import jax
import jax.numpy as jnp
from jax.experimental import pallas as pl
from jax.experimental.pallas import tpu as pltpu


def _logistic_kernel(params_ref, x_ref, o_ref):
    # params_ref: SMEM, shape (2,): [k, x0]
    k = params_ref[0]
    x0 = params_ref[1]
    xv = x_ref[...].astype(jnp.float32)          # f32 compute (v5e-safe)
    denom = 1.0 + jnp.exp(-k * (xv - x0))        # L = 1
    o_ref[...] = pl.reciprocal(denom, approx=False).astype(o_ref.dtype)


def logistic_model_forward(x, k, x0):
    """x: any-shape array (NCHW in the reference). k, x0: (1,) or scalar."""
    orig_shape = x.shape
    dtype = x.dtype
    flat = x.reshape(-1)
    n = flat.shape[0]

    LANES = 128
    # Pick the widest lane-dense width that divides n exactly (no padding copy).
    width = None
    for w in (16384, 8192, 4096, 2048, 1024, 512, 256, 128):
        if n % w == 0:
            width = w
            break
    padded = False
    if width is None:
        # Rare fallback: pad to a multiple of 128 (only then do we copy).
        pad = (-n) % LANES
        flat = jnp.pad(flat, (0, pad))
        width = LANES
        padded = True

    rows = flat.shape[0] // width
    x2d = flat.reshape(rows, width)

    # ~4 MiB per block: on the HBM-roofline plateau, and 2x(in)+2x(out)
    # double-buffers fit every chip's scoped VMEM with headroom.
    bytes_per_elem = jnp.dtype(dtype).itemsize
    target_rows = max(1, (4 * 1024 * 1024) // (width * bytes_per_elem))
    if rows <= target_rows:
        tile_rows = rows                    # single full-extent block (always legal)
    else:
        tile_rows = max(8, (min(target_rows, rows) // 8) * 8)  # multiple of 8
    grid = pl.cdiv(rows, tile_rows)         # Pallas masks the boundary block

    params = jnp.stack(
        [jnp.asarray(k).reshape(()), jnp.asarray(x0).reshape(())]
    ).astype(jnp.float32)

    out2d = pl.pallas_call(
        _logistic_kernel,
        out_shape=jax.ShapeDtypeStruct((rows, width), dtype),
        grid_spec=pltpu.PrefetchScalarGridSpec(
            num_scalar_prefetch=0,
            grid=(grid,),
            in_specs=[
                pl.BlockSpec(memory_space=pltpu.MemorySpace.SMEM),
                pl.BlockSpec((tile_rows, width), lambda i: (i, 0)),
            ],
            out_specs=pl.BlockSpec((tile_rows, width), lambda i: (i, 0)),
        ),
        compiler_params=pltpu.CompilerParams(
            dimension_semantics=("parallel",),
            vmem_limit_bytes=32 * 1024 * 1024,
        ),
    )(params, x2d)

    out_flat = out2d.reshape(-1)
    if padded:
        out_flat = out_flat[:n]
    return out_flat.reshape(orig_shape)


if __name__ == "__main__":
    key = jax.random.PRNGKey(0)
    kx, kk, k0 = jax.random.split(key, 3)

    # deterministic "parameters" (torch.randn(1) equivalents)
    k_param = jax.random.normal(kk, (1,), jnp.float32)
    x0_param = jax.random.normal(k0, (1,), jnp.float32)

    # small NCHW input consistent with the module's elementwise forward
    x = jax.random.normal(kx, (2, 4, 16, 16), jnp.float32)

    out = logistic_model_forward(x, k_param, x0_param)
    out = jax.block_until_ready(out)

    # reference check in plain JAX
    ref = 1.0 / (1.0 + jnp.exp(-k_param[0] * (x - x0_param[0])))
    assert out.shape == x.shape
    assert out.dtype == x.dtype
    assert jnp.allclose(out, ref, atol=1e-6, rtol=1e-6)

    print("KERNEL_OK")
</pallas_src>

<mosaic_0001>
module attributes {stable_mosaic.version = 11 : i64} {
  func.func @_logistic_kernel(%arg0: i32, %arg1: memref<2xf32, #tpu.memory_space<smem>>, %arg2: memref<1x2048xf32, #tpu.memory_space<vmem>>, %arg3: memref<1x2048xf32, #tpu.memory_space<vmem>>) attributes {dimension_semantics = [#tpu.dimension_semantics<parallel>], iteration_bounds = array<i64: 1>, scalar_prefetch = 0 : i64, scratch_operands = 0 : i64, tpu.core_type = #tpu.core_type<tc>, window_params = [{transform_indices = @transform_0, window_bounds = array<i64: 2>}, {transform_indices = @transform_1, window_bounds = array<i64: 1, 2048>}, {transform_indices = @transform_2, window_bounds = array<i64: 1, 2048>}]} {
    %c0 = arith.constant 0 : index
    %0 = memref.load %arg1[%c0] : memref<2xf32, #tpu.memory_space<smem>>
    %c1 = arith.constant 1 : index
    %1 = memref.load %arg1[%c1] : memref<2xf32, #tpu.memory_space<smem>>
    %c0_0 = arith.constant 0 : index
    %c0_1 = arith.constant 0 : index
    %2 = vector.load %arg2[%c0_0, %c0_1] : memref<1x2048xf32, #tpu.memory_space<vmem>>, vector<1x2048xf32>
    %cst = arith.constant 0.000000e+00 : f32
    %3 = arith.subf %cst, %0 : f32
    %4 = vector.broadcast %1 : f32 to vector<1x2048xf32>
    %5 = arith.subf %2, %4 : vector<1x2048xf32>
    %6 = vector.broadcast %3 : f32 to vector<1x2048xf32>
    %7 = arith.mulf %6, %5 : vector<1x2048xf32>
    %8 = math.exp %7 : vector<1x2048xf32>
    %cst_2 = arith.constant 1.000000e+00 : f32
    %9 = vector.broadcast %cst_2 : f32 to vector<1x2048xf32>
    %10 = arith.addf %9, %8 : vector<1x2048xf32>
    %11 = tpu.reciprocal %10 : vector<1x2048xf32> -> vector<1x2048xf32>
    %c0_3 = arith.constant 0 : index
    %c0_4 = arith.constant 0 : index
    %12 = vector.load %arg3[%c0_3, %c0_4] : memref<1x2048xf32, #tpu.memory_space<vmem>>, vector<1x2048xf32>
    tpu.vector_store %arg3[%c0_3, %c0_4], %11 {strides = array<i32>} : memref<1x2048xf32, #tpu.memory_space<vmem>>, vector<1x2048xf32>,
    return
  }
  func.func @transform_0(%arg0: i32) -> i32 {
    %c0_i32 = arith.constant 0 : i32
    %c0_i32_0 = arith.constant 0 : i32
    return %c0_i32 : i32
  }
  func.func @transform_1(%arg0: i32) -> (i32, i32) {
    %c0_i32 = arith.constant 0 : i32
    %c0_i32_0 = arith.constant 0 : i32
    return %arg0, %c0_i32 : i32, i32
  }
  func.func @transform_2(%arg0: i32) -> (i32, i32) {
    %c0_i32 = arith.constant 0 : i32
    %c0_i32_0 = arith.constant 0 : i32
    return %arg0, %c0_i32 : i32, i32
  }
}

</mosaic_0001>

<llo_original>
// kernel: tpu_custom_call.1
$region0: #{tpu_custom_call.1}
  #allocation0 [shape = 'u32[]', space=smem, size = 0x4, offset = 0x4, fixed_abs, tag = 'smem constant byte address 0x4 - core index']
  #allocation1 [shape = 'u32[144,128]{1,0:T(1,128)}', space=vmem, size = 0x12000, scoped, tag = 'internal scratch']
  %s0 = inlined_call_operand.hbm [shape: f32[2], index: 0, kind: input, shape index: {}]
  %s1 = inlined_call_operand.hbm [shape: f32[1,2048], index: 1, kind: input, shape index: {}]
  %s2 = inlined_call_operand.hbm [shape: f32[1,2048], index: 2, kind: output, shape index: {}]
  %s3 = sld [smem:[#allocation0]]
  $region26: #{tpu_custom_call.1} parent=0
    _
  %s5 = ssub.s32 1, %s3
  %s6 = scalar_select 0, %s5, %s3
  $region1: #{tpu_custom_call.1} parent=0
    #allocation2 [shape = 'u8[512]{0}', space=smem, size = 0x200, scoped, tag = 'input window, operand 0, single buffered']
    #allocation3 [shape = 's32[1]{0}', space=sflag, size = 0x4, scoped, tag = 'scoped memory for tpu_custom_call.1']
    #allocation4 [shape = 's32[1]{0}', space=sflag, size = 0x4, scoped, tag = 'scoped memory for tpu_custom_call.1']
    #allocation5 [shape = 's32[1]{0}', space=sflag, size = 0x4, scoped, tag = 'scoped memory for tpu_custom_call.1']
    #allocation6 [shape = 'u8[8192]{0}', space=vmem, size = 0x2000, scoped, tag = 'input window, operand 1, single buffered']
    #allocation7 [shape = 'u8[8192]{0}', space=vmem, size = 0x2000, scoped, tag = 'output window, operand 0, single buffered']
    %7 = vsyncpa [#allocation5], 0
    %8 = vsyncpa [#allocation3], 0
    %9 = vsyncpa [#allocation4], 0
    // Predicated region
    $region2: #{tpu_custom_call.1} parent=1 // pred_check
      _
    $region3: #{tpu_custom_call.1} parent=1 // pred_check_branch
      %11 = sbr.rel (0) target = $region5
    $region4: #{tpu_custom_call.1} parent=1 // pred_region
      %s13 = ssub.s32 16, 16
      %14 = vsyncadd [#allocation5], %s13
      %17 = dma.hbm_to_smem %s0, 16, [#allocation2], [#allocation5]
    $region5: #{tpu_custom_call.1} parent=1 // pred_fallthru
      _
    // Predicated region
    $region6: #{tpu_custom_call.1} parent=1 // pred_check
      _
    $region7: #{tpu_custom_call.1} parent=1 // pred_check_branch
      %19 = sbr.rel (0) target = $region9
    $region8: #{tpu_custom_call.1} parent=1 // pred_region
      %s21 = ssub.s32 256, 256
      %22 = vsyncadd [#allocation3], %s21
      %s24 = sshll.u32 [#allocation6], 4
      %s25 = int_to_ptr.vmem [resolvable:$true] %s24
      %27 = dma.hbm_to_vmem [thread:$0]  %s1, 256, %s25, [#allocation3]
    $region9: #{tpu_custom_call.1} parent=1 // pred_fallthru
      _
    // Predicated region
    $region10: #{tpu_custom_call.1} parent=1 // pred_check
      _
    $region11: #{tpu_custom_call.1} parent=1 // pred_check_branch
      %29 = sbr.rel (0) target = $region13
    $region12: #{tpu_custom_call.1} parent=1 // pred_region
      %30 = dma.done [#allocation5], 16
    $region13: #{tpu_custom_call.1} parent=1 // pred_fallthru
      _
    // Predicated region
    $region14: #{tpu_custom_call.1} parent=1 // pred_check
      _
    $region15: #{tpu_custom_call.1} parent=1 // pred_check_branch
      %32 = sbr.rel (0) target = $region17
    $region16: #{tpu_custom_call.1} parent=1 // pred_region
      %33 = dma.done [#allocation3], 256
    $region17: #{tpu_custom_call.1} parent=1 // pred_fallthru
      _
    %34 = sfence
    %s35 = sld [smem:[#allocation2]]
    %s36 = sld [smem:[#allocation2 + $0x1]]
    %v37 = vld [vmem:[#allocation6] sm:$0xff]
    %v38 = vld [vmem:[#allocation6 + $0x8] sm:$0xff]
    %s39 = ssub.f32 0.0, %s35
    %v40 = vstv %s36
    %v41 = vsub.f32 %v37, %v40
    %v42 = vsub.f32 %v38, %v40
    %v43 = vstv %s39
    %v44 = vmul.f32 %v43, %v41
    %v45 = vmul.f32 %v43, %v42
    %v46 = vmul.f32 %v44, 1.442695
    %v47 = vpow.pop %v46
    %v48 = vmul.f32 %v45, 1.442695
    %v49 = vpow.pop %v48
    %v50 = vadd.f32 %v47, 1.0
    %v51 = vadd.f32 %v49, 1.0
    %v52 = vrcp.pop %v50
    %v53 = vrcp.pop %v51
    %54 = vst [vmem:[#allocation7] sm:$0xff] %v52
    %55 = vst [vmem:[#allocation7 + $0x8] sm:$0xff] %v53
    // Predicated region
    $region18: #{tpu_custom_call.1} parent=1 // pred_check
      _
    $region19: #{tpu_custom_call.1} parent=1 // pred_check_branch
      %57 = sbr.rel (0) target = $region21
    $region20: #{tpu_custom_call.1} parent=1 // pred_region
      %s59 = ssub.s32 256, 256
      %60 = vsyncadd [#allocation4], %s59
      %s62 = sshll.u32 [#allocation7], 4
      %s63 = int_to_ptr.vmem [resolvable:$true] %s62
      %65 = dma.vmem_to_hbm [thread:$0]  %s63, 256, %s2, [#allocation4]
    $region21: #{tpu_custom_call.1} parent=1 // pred_fallthru
      _
    // Predicated region
    $region22: #{tpu_custom_call.1} parent=1 // pred_check
      _
    $region23: #{tpu_custom_call.1} parent=1 // pred_check_branch
      %67 = sbr.rel (0) target = $region25
    $region24: #{tpu_custom_call.1} parent=1 // pred_region
      %68 = dma.done [#allocation4], 256
    $region25: #{tpu_custom_call.1} parent=1 // pred_fallthru
      _
    %69 = vsyncpa [#allocation3], 1
    %70 = vsyncpa [#allocation4], 1
    %71 = vsyncpa [#allocation5], 1

</llo_original>
